<compile_context>
chip_gen: v7x
topology: tpu7x:2x2x1
jax: 0.10.0
libtpu: 0.0.40
codegen_flags: <defaults>
</compile_context>

<pallas_src>
import functools

import jax
import jax.numpy as jnp
from jax.experimental import pallas as pl
from jax.experimental.pallas import tpu as pltpu

# Hyperparameters fixed by the PyTorch module.
CIN, COUT = 3, 96
KH = KW = 11
STRIDE = 4
LRN_SIZE, LRN_ALPHA, LRN_BETA, LRN_K = 5, 1e-4, 0.75, 2.0
POOL_K, POOL_S = 3, 2

# Padded sizes used inside the kernel (lane-dense layouts).
K_RAW = CIN * KH * KW            # 363
K_PAD = 384                      # next multiple of 128 (MXU contraction dim)
C_PAD = 128                      # output channels padded 96 -> 128 (pads stay exactly 0)


def _round_up(x, m):
    return ((x + m - 1) // m) * m


def _c1_kernel(p_ref, w_ref, b_ref, o_ref, *, rc, wo_pad, r_pool, w_out):
    """Fused conv(matmul) + ReLU + LRN + 3x3/2 max-pool for one row-chunk of one image.

    p_ref: (1, 1, rc*wo_pad, K_PAD) bf16   im2col patches for rc conv rows (zero-padded)
    w_ref: (K_PAD, C_PAD)           bf16   conv weight as matmul operand (zero-padded)
    b_ref: (1, C_PAD)               f32    conv bias (zero-padded)
    o_ref: (1, r_pool, w_out, C_PAD) f32   H-pooled rows, W-direction 3-windows at every
                                           column offset; stride-2 column selection happens
                                           in the wrapper epilogue.
    """
    p = p_ref[0, 0]                                            # (rc*wo_pad, K_PAD) bf16

    # ---- Convolution as a single MXU matmul (bf16 x bf16 -> f32) + bias + ReLU ----
    y = jnp.dot(p, w_ref[...], preferred_element_type=jnp.float32) + b_ref[...]
    y = jnp.maximum(y, 0.0)                                    # lanes 96..127 stay exactly 0

    # ---- LocalResponseNorm across channels (VPU/XLU/EUP, no MXU) ------------------
    # Sliding +/-2 channel sum of squares via lane rotations; the circular wrap is
    # exact only because the padded channel lanes (96..127) are identically zero.
    sq = y * y
    s = sq
    s = s + pltpu.roll(sq, 1, axis=1) + pltpu.roll(sq, C_PAD - 1, axis=1)
    s = s + pltpu.roll(sq, 2, axis=1) + pltpu.roll(sq, C_PAD - 2, axis=1)
    base = LRN_K + (LRN_ALPHA / LRN_SIZE) * s
    r = jax.lax.rsqrt(base)                                    # base^(-1/2)   (EUP)
    y = y * (r * jnp.sqrt(r))                                  # y * base^(-3/4)

    # ---- MaxPool2d(kernel=3, stride=2), vectorized ---------------------------------
    # wo_pad is a multiple of 8, so this reshape is a free leading-dim regroup.
    ysp = y.reshape(rc, wo_pad, C_PAD)
    # H direction (rows 2k, 2k+1, 2k+2): leading-dim regrouping only.
    a = ysp[0:2 * r_pool].reshape(r_pool, 2, wo_pad, C_PAD)    # [:,0]=rows 2k, [:,1]=2k+1
    c = ysp[1:2 * r_pool + 1].reshape(r_pool, 2, wo_pad, C_PAD)  # [:,1]=rows 2k+2
    rowmax = jnp.maximum(jnp.maximum(a[:, 0], a[:, 1]), c[:, 1])   # (r_pool, wo_pad, C_PAD)
    # W direction: 3 shifted full-width maxima; stride-2 column selection deferred to
    # the wrapper epilogue (keeps the kernel free of strided sublane slices).
    wmax = jnp.maximum(jnp.maximum(rowmax[:, 0:w_out], rowmax[:, 1:w_out + 1]),
                       rowmax[:, 2:w_out + 2])                 # (r_pool, w_out, C_PAD)
    o_ref[0] = wmax


def c1_forward(x_nchw, weight, bias, *, rows_per_step=8):
    """x_nchw: (N, 3, H, W) float32; weight: (96, 3, 11, 11); bias: (96,)."""
    N, Cin, H, W = x_nchw.shape
    assert Cin == CIN
    Ho = (H - KH) // STRIDE + 1
    Wo = (W - KW) // STRIDE + 1
    Hp = (Ho - POOL_K) // POOL_S + 1
    Wp = (Wo - POOL_K) // POOL_S + 1
    assert Hp >= 1 and Wp >= 1
    assert 2 * Hp + 1 <= Ho and 2 * Wp + 1 <= Wo   # VALID 3/2 pooling geometry

    # Row tiling: T chunks of r_pool pooled rows each (second parallel grid axis).
    T = pl.cdiv(Hp, rows_per_step)
    r_pool = pl.cdiv(Hp, T)                  # balanced -> minimal end-of-image padding
    T = pl.cdiv(Hp, r_pool)
    rc = 2 * r_pool + 1                      # conv rows per chunk (1-row overlap, duplicated)
    ho_need = 2 * r_pool * T + 1             # conv rows needed incl. end padding
    wo_pad = _round_up(Wo, 8)                # sublane-aligned width
    w_out = wo_pad - 2

    # im2col via a single fused identity-kernel convolution, in bf16. Feature ordering is
    # channel-major, spatial row-major: idx = c*KH*KW + kh*KW + kw, matching PyTorch's
    # weight.reshape(COUT, CIN*KH*KW).
    x_bf = x_nchw.astype(jnp.bfloat16)
    patches = jax.lax.conv_general_dilated_patches(
        x_bf,
        filter_shape=(KH, KW),
        window_strides=(STRIDE, STRIDE),
        padding="VALID",
        dimension_numbers=("NCHW", "OIHW", "NCHW"),
    )                                                          # (N, K_RAW, Ho, Wo) bf16
    patches = patches.transpose(0, 2, 3, 1)                    # (N, Ho, Wo, K_RAW)
    patches = jnp.pad(patches, ((0, 0), (0, ho_need - Ho),
                                (0, wo_pad - Wo), (0, K_PAD - K_RAW)))
    # Chunk the conv rows; only the single boundary row per chunk is duplicated.
    row_idx = 2 * r_pool * jnp.arange(T)[:, None] + jnp.arange(rc)[None, :]   # (T, rc)
    chunks = patches[:, row_idx]                               # (N, T, rc, wo_pad, K_PAD)
    chunks = chunks.reshape(N, T, rc * wo_pad, K_PAD)

    w_mat = weight.reshape(COUT, K_RAW).T.astype(jnp.float32)            # (K_RAW, COUT)
    w_mat = jnp.pad(w_mat, ((0, K_PAD - K_RAW), (0, C_PAD - COUT)))      # zero pads
    w_mat = w_mat.astype(jnp.bfloat16)
    b_mat = jnp.pad(bias.astype(jnp.float32).reshape(1, COUT),
                    ((0, 0), (0, C_PAD - COUT)))

    kernel = functools.partial(_c1_kernel, rc=rc, wo_pad=wo_pad,
                               r_pool=r_pool, w_out=w_out)
    out_full = pl.pallas_call(
        kernel,
        out_shape=jax.ShapeDtypeStruct((N, T * r_pool, w_out, C_PAD), jnp.float32),
        grid_spec=pltpu.PrefetchScalarGridSpec(
            num_scalar_prefetch=0,
            grid=(N, T),
            in_specs=[
                pl.BlockSpec((1, 1, rc * wo_pad, K_PAD), lambda n, t: (n, t, 0, 0)),
                # weight / bias index maps are constant; pipeline_mode=pl.Buffered(1)
                # would shave a small amount of VMEM but is left out for compile safety.
                pl.BlockSpec((K_PAD, C_PAD), lambda n, t: (0, 0)),
                pl.BlockSpec((1, C_PAD), lambda n, t: (0, 0)),
            ],
            out_specs=pl.BlockSpec((1, r_pool, w_out, C_PAD),
                                   lambda n, t: (n, t, 0, 0)),
        ),
        compiler_params=pltpu.CompilerParams(
            dimension_semantics=("parallel", "parallel"),
        ),
    )(chunks, w_mat, b_mat)

    # Tiny XLA epilogue: crop padded pooled rows, stride-2 even-column selection of the
    # W-direction pool, drop padded channels, NHWC -> NCHW.
    pooled = out_full[:, :Hp, 0:2 * Wp - 1:2, :COUT]           # (N, Hp, Wp, COUT)
    return pooled.transpose(0, 3, 1, 2)


def c1_reference(x_nchw, weight, bias):
    """Pure-JAX reference reproducing PyTorch semantics (for validation)."""
    out = jax.lax.conv_general_dilated(
        x_nchw, weight, (STRIDE, STRIDE), "VALID",
        dimension_numbers=("NCHW", "OIHW", "NCHW"),
        precision=jax.lax.Precision.HIGHEST)
    out = out + bias[None, :, None, None]
    out = jnp.maximum(out, 0.0)
    # LRN (PyTorch: zero-padded channel window, divide by n always)
    sq = out * out
    pad = LRN_SIZE // 2
    sq_p = jnp.pad(sq, ((0, 0), (pad, pad), (0, 0), (0, 0)))
    s = sum(sq_p[:, i:i + out.shape[1]] for i in range(LRN_SIZE))
    div = (LRN_K + (LRN_ALPHA / LRN_SIZE) * s) ** LRN_BETA
    out = out / div
    # MaxPool2d(3, 2)
    out = jax.lax.reduce_window(
        out, -jnp.inf, jax.lax.max,
        (1, 1, POOL_K, POOL_K), (1, 1, POOL_S, POOL_S), "VALID")
    return out


if __name__ == "__main__":
    key = jax.random.PRNGKey(0)
    kx, kw, kb = jax.random.split(key, 3)

    # Small shapes consistent with the module: 35x35 -> conv 7x7 -> pool 3x3.
    N, H, W = 2, 35, 35
    x = jax.random.normal(kx, (N, CIN, H, W), dtype=jnp.float32)
    weight = 0.02 * jax.random.normal(kw, (COUT, CIN, KH, KW), dtype=jnp.float32)
    bias = 0.01 * jax.random.normal(kb, (COUT,), dtype=jnp.float32)

    out = c1_forward(x, weight, bias)
    jax.block_until_ready(out)

    # Tight check: reference fed with the same bf16-rounded conv operands the kernel uses
    # (accumulation is f32 in both), so only kernel-side approximations remain.
    x_r = x.astype(jnp.bfloat16).astype(jnp.float32)
    w_r = weight.astype(jnp.bfloat16).astype(jnp.float32)
    ref_bf = c1_reference(x_r, w_r, bias)
    assert out.shape == ref_bf.shape, (out.shape, ref_bf.shape)
    assert bool(jnp.allclose(out, ref_bf, atol=1e-2, rtol=1e-2)), "mismatch vs bf16-rounded reference"

    # Loose check against the unrounded f32 module semantics (covers the deliberate bf16 cast).
    ref = c1_reference(x, weight, bias)
    assert bool(jnp.allclose(out, ref, atol=5e-2, rtol=5e-2)), "mismatch vs f32 reference"

    print("KERNEL_OK")
</pallas_src>

<mosaic_0001>
module attributes {stable_mosaic.version = 11 : i64} {
  func.func @_c1_kernel(%arg0: i32, %arg1: i32, %arg2: memref<1x1x56x384xbf16, #tpu.memory_space<vmem>>, %arg3: memref<384x128xbf16, #tpu.memory_space<vmem>>, %arg4: memref<1x128xf32, #tpu.memory_space<vmem>>, %arg5: memref<1x3x6x128xf32, #tpu.memory_space<vmem>>) attributes {dimension_semantics = [#tpu.dimension_semantics<parallel>, #tpu.dimension_semantics<parallel>], iteration_bounds = array<i64: 2, 1>, scalar_prefetch = 0 : i64, scratch_operands = 0 : i64, tpu.core_type = #tpu.core_type<tc>, window_params = [{transform_indices = @transform_0, window_bounds = array<i64: 1, 1, 56, 384>}, {pipeline_mode = #tpu.pipeline_mode<synchronous>, transform_indices = @transform_1, window_bounds = array<i64: 384, 128>}, {pipeline_mode = #tpu.pipeline_mode<synchronous>, transform_indices = @transform_2, window_bounds = array<i64: 1, 128>}, {transform_indices = @transform_3, window_bounds = array<i64: 1, 3, 6, 128>}]} {
    %c0 = arith.constant 0 : index
    %c0_0 = arith.constant 0 : index
    %c0_1 = arith.constant 0 : index
    %c0_2 = arith.constant 0 : index
    %0 = vector.load %arg2[%c0, %c0_0, %c0_1, %c0_2] : memref<1x1x56x384xbf16, #tpu.memory_space<vmem>>, vector<1x1x56x384xbf16>
    %1 = vector.shape_cast %0 : vector<1x1x56x384xbf16> to vector<56x384xbf16>
    %c0_3 = arith.constant 0 : index
    %c0_4 = arith.constant 0 : index
    %2 = vector.load %arg3[%c0_3, %c0_4] : memref<384x128xbf16, #tpu.memory_space<vmem>>, vector<384x128xbf16>
    %cst = arith.constant dense<0.000000e+00> : vector<56x128xf32>
    %3 = tpu.matmul %1, %2, %cst {dimension_numbers = #tpu.dot_dimension_numbers<[1], [0], [0], [1], [0, 0, 1, 1], [], []>} : vector<56x384xbf16>, vector<384x128xbf16>, vector<56x128xf32> -> vector<56x128xf32>
    %c0_5 = arith.constant 0 : index
    %c0_6 = arith.constant 0 : index
    %4 = vector.load %arg4[%c0_5, %c0_6] : memref<1x128xf32, #tpu.memory_space<vmem>>, vector<1x128xf32>
    %5 = vector.broadcast %4 : vector<1x128xf32> to vector<56x128xf32>
    %6 = arith.addf %3, %5 : vector<56x128xf32>
    %cst_7 = arith.constant 0.000000e+00 : f32
    %7 = vector.broadcast %cst_7 : f32 to vector<56x128xf32>
    %8 = arith.maximumf %6, %7 : vector<56x128xf32>
    %9 = arith.mulf %8, %8 : vector<56x128xf32>
    %c1_i32 = arith.constant 1 : i32
    %10 = tpu.dynamic_rotate %9 by %c1_i32 dim 1 : vector<56x128xf32>, i32 -> vector<56x128xf32>
    %11 = arith.addf %9, %10 : vector<56x128xf32>
    %c127_i32 = arith.constant 127 : i32
    %12 = tpu.dynamic_rotate %9 by %c127_i32 dim 1 : vector<56x128xf32>, i32 -> vector<56x128xf32>
    %13 = arith.addf %11, %12 : vector<56x128xf32>
    %c2_i32 = arith.constant 2 : i32
    %14 = tpu.dynamic_rotate %9 by %c2_i32 dim 1 : vector<56x128xf32>, i32 -> vector<56x128xf32>
    %15 = arith.addf %13, %14 : vector<56x128xf32>
    %c126_i32 = arith.constant 126 : i32
    %16 = tpu.dynamic_rotate %9 by %c126_i32 dim 1 : vector<56x128xf32>, i32 -> vector<56x128xf32>
    %17 = arith.addf %15, %16 : vector<56x128xf32>
    %cst_8 = arith.constant 2.000000e-05 : f32
    %18 = vector.broadcast %cst_8 : f32 to vector<56x128xf32>
    %19 = arith.mulf %18, %17 : vector<56x128xf32>
    %cst_9 = arith.constant 2.000000e+00 : f32
    %20 = vector.broadcast %cst_9 : f32 to vector<56x128xf32>
    %21 = arith.addf %20, %19 : vector<56x128xf32>
    %22 = math.rsqrt %21 : vector<56x128xf32>
    %23 = math.sqrt %22 : vector<56x128xf32>
    %24 = arith.mulf %22, %23 : vector<56x128xf32>
    %25 = arith.mulf %8, %24 : vector<56x128xf32>
    %26 = vector.shape_cast %25 : vector<56x128xf32> to vector<7x8x128xf32>
    %27 = vector.extract_strided_slice %26 {offsets = [0, 0, 0], sizes = [6, 8, 128], strides = [1, 1, 1]} : vector<7x8x128xf32> to vector<6x8x128xf32>
    %28 = vector.shape_cast %27 : vector<6x8x128xf32> to vector<3x2x8x128xf32>
    %29 = vector.extract_strided_slice %26 {offsets = [1, 0, 0], sizes = [6, 8, 128], strides = [1, 1, 1]} : vector<7x8x128xf32> to vector<6x8x128xf32>
    %30 = vector.shape_cast %29 : vector<6x8x128xf32> to vector<3x2x8x128xf32>
    %31 = vector.extract_strided_slice %28 {offsets = [0, 0, 0, 0], sizes = [3, 1, 8, 128], strides = [1, 1, 1, 1]} : vector<3x2x8x128xf32> to vector<3x1x8x128xf32>
    %32 = vector.shape_cast %31 : vector<3x1x8x128xf32> to vector<3x8x128xf32>
    %33 = vector.extract_strided_slice %28 {offsets = [0, 1, 0, 0], sizes = [3, 1, 8, 128], strides = [1, 1, 1, 1]} : vector<3x2x8x128xf32> to vector<3x1x8x128xf32>
    %34 = vector.shape_cast %33 : vector<3x1x8x128xf32> to vector<3x8x128xf32>
    %35 = arith.maximumf %32, %34 : vector<3x8x128xf32>
    %36 = vector.extract_strided_slice %30 {offsets = [0, 1, 0, 0], sizes = [3, 1, 8, 128], strides = [1, 1, 1, 1]} : vector<3x2x8x128xf32> to vector<3x1x8x128xf32>
    %37 = vector.shape_cast %36 : vector<3x1x8x128xf32> to vector<3x8x128xf32>
    %38 = arith.maximumf %35, %37 : vector<3x8x128xf32>
    %39 = vector.extract_strided_slice %38 {offsets = [0, 0, 0], sizes = [3, 6, 128], strides = [1, 1, 1]} : vector<3x8x128xf32> to vector<3x6x128xf32>
    %40 = vector.extract_strided_slice %38 {offsets = [0, 1, 0], sizes = [3, 6, 128], strides = [1, 1, 1]} : vector<3x8x128xf32> to vector<3x6x128xf32>
    %41 = arith.maximumf %39, %40 : vector<3x6x128xf32>
    %42 = vector.extract_strided_slice %38 {offsets = [0, 2, 0], sizes = [3, 6, 128], strides = [1, 1, 1]} : vector<3x8x128xf32> to vector<3x6x128xf32>
    %43 = arith.maximumf %41, %42 : vector<3x6x128xf32>
    %c0_10 = arith.constant 0 : index
    %c0_11 = arith.constant 0 : index
    %c0_12 = arith.constant 0 : index
    %c0_13 = arith.constant 0 : index
    %44 = vector.load %arg5[%c0_10, %c0_11, %c0_12, %c0_13] : memref<1x3x6x128xf32, #tpu.memory_space<vmem>>, vector<1x3x6x128xf32>
    %45 = vector.shape_cast %44 : vector<1x3x6x128xf32> to vector<3x6x128xf32>
    %46 = vector.shape_cast %43 : vector<3x6x128xf32> to vector<1x3x6x128xf32>
    tpu.vector_store %arg5[%c0_10, %c0_11, %c0_12, %c0_13], %46 {strides = array<i32>} : memref<1x3x6x128xf32, #tpu.memory_space<vmem>>, vector<1x3x6x128xf32>,
    return
  }
  func.func @transform_0(%arg0: i32, %arg1: i32) -> (i32, i32, i32, i32) {
    %c0_i32 = arith.constant 0 : i32
    %c0_i32_0 = arith.constant 0 : i32
    %c0_i32_1 = arith.constant 0 : i32
    return %arg0, %arg1, %c0_i32, %c0_i32_0 : i32, i32, i32, i32
  }
  func.func @transform_1(%arg0: i32, %arg1: i32) -> (i32, i32) {
    %c0_i32 = arith.constant 0 : i32
    %c0_i32_0 = arith.constant 0 : i32
    %c0_i32_1 = arith.constant 0 : i32
    return %c0_i32, %c0_i32_0 : i32, i32
  }
  func.func @transform_2(%arg0: i32, %arg1: i32) -> (i32, i32) {
    %c0_i32 = arith.constant 0 : i32
    %c0_i32_0 = arith.constant 0 : i32
    %c0_i32_1 = arith.constant 0 : i32
    return %c0_i32, %c0_i32_0 : i32, i32
  }
  func.func @transform_3(%arg0: i32, %arg1: i32) -> (i32, i32, i32, i32) {
    %c0_i32 = arith.constant 0 : i32
    %c0_i32_0 = arith.constant 0 : i32
    %c0_i32_1 = arith.constant 0 : i32
    return %arg0, %arg1, %c0_i32, %c0_i32_0 : i32, i32, i32, i32
  }
}

</mosaic_0001>

<llo_original>
// kernel: tpu_custom_call.1
$region0: #{tpu_custom_call.1}
  #allocation0 [shape = 'u32[]', space=smem, size = 0x4, offset = 0x4, fixed_abs, tag = 'smem constant byte address 0x4 - core index']
  #allocation1 [shape = 'u32[144,128]{1,0:T(1,128)}', space=vmem, size = 0x12000, scoped, tag = 'internal scratch']
  %s0 = inlined_call_operand.hbm [shape: bf16[2,1,56,384], index: 0, kind: input, shape index: {}]
  %s1 = inlined_call_operand.hbm [shape: bf16[384,128], index: 1, kind: input, shape index: {}]
  %s2 = inlined_call_operand.vmem [shape: f32[1,128], index: 2, kind: input, shape index: {}]
  %s3 = inlined_call_operand.vmem [shape: f32[2,3,6,128], index: 3, kind: output, shape index: {}]
  %s4 = sld [smem:[#allocation0]]
  $region53: #{tpu_custom_call.1} parent=0
    _
  %s6 = ssub.s32 1, %s4
  %s7 = scalar_select 0, %s6, %s4
  $region1: #{tpu_custom_call.1} parent=0
    #allocation2 [shape = 'u8[86016]{0}', space=vmem, size = 0x15000, scoped, tag = 'input window, operand 0']
    #allocation3 [shape = 's32[2]{0}', space=sflag, size = 0x8, scoped, tag = 'scoped memory for tpu_custom_call.1']
    #allocation4 [shape = 'u8[98304]{0}', space=vmem, size = 0x18000, scoped, tag = 'input window, operand 1, single buffered']
    #allocation5 [shape = 's32[1]{0}', space=sflag, size = 0x4, scoped, tag = 'scoped memory for tpu_custom_call.1']
    %8 = vsyncpa [#allocation3], 0
    %s9 = scalar_lea.sflag [#allocation3], 1
    %10 = vsyncpa %s9, 0
    %11 = vsyncpa [#allocation5], 0
    loop: start=0, step=1, limit=4
    $region2: #{tpu_custom_call.1} parent=1 // loop_pre_header
      _
    $region3: #{tpu_custom_call.1} parent=1 // loop_header
      %s13 = sphi 0, %s17
      %p14 = scmp.ge.s32.totalorder %s13, 4
      %s20 = sphi 0, %s32
      %s21 = sphi 0, %s28
      %s22 = sphi 0, %s20
      %s23 = sphi 0, %s21
      %s24 = sphi 0, %s22
      %s25 = sphi 0, %s23
      %s37 = sphi 0, %s39
      %s40 = sphi 0, %s37
      %s41 = sphi 0, %s40
      %s57 = sphi 0, %s41
      %s61 = sphi 0, %s61
      %s63 = sphi 0, %s61
      %s64 = sphi 0, %s63
      %s78 = sphi 0, %s64
      %s82 = sphi 0, %s82
      %s84 = sphi 0, %s82
      %s85 = sphi 0, %s84
      %s99 = sphi 0, %s85
      %s107 = sphi 0, %s109
      %s110 = sphi 0, %s107
      %s111 = sphi 0, %s110
      %s127 = sphi 0, %s111
    $region4: #{tpu_custom_call.1} parent=1 // loop_header_branch
      %16 = sbr.rel (%p14) target = $region8
    $region5: #{tpu_custom_call.1} parent=1 // loop_body
      %s18 = ssub.s32 %s13, 1
      %s19 = ssub.s32 %s13, 2
      %s26 = sadd.s32 1, %s21
      %p27 = scmp.ge.s32.totalorder %s26, 1
      %s28 = scalar_select %p27, 0, %s26
      %s29 = sadd.s32 1, %s20
      %s30 = scalar_select %p27, %s29, %s20
      %p31 = scmp.ge.s32.totalorder %s30, 2
      %s32 = scalar_select %p31, 0, %s30
      %s33 = ssub.s32 %s20, %s32
      %s34 = ssub.s32 %s21, %s28
      %s35 = sor.u32 %s33, %s34
      %p36 = scmp.eq.s32.totalorder %s35, 0
      %s38 = sadd.s32 %s37, 1
      %s39 = scalar_select %p36, %s37, %s38
      %p42 = pneg %p36
      %p43 = scmp.eq.s32.totalorder %s13, 1
      %p44 = por %p42, %p43
      %p45 = scmp.ne.s32.totalorder %s37, %s40
      %p46 = scmp.eq.s32.totalorder %s13, 0
      %p47 = por %p45, %p46
      %p48 = scmp.ne.s32.totalorder %s37, %s40
      %p49 = scmp.eq.s32.totalorder %s18, 1
      %p50 = por %p48, %p49
      %p51 = scmp.ne.s32.totalorder %s40, %s41
      %p52 = scmp.eq.s32.totalorder %s18, 0
      %p53 = por %p51, %p52
      %p54 = scmp.ne.s32.totalorder %s40, %s41
      %p55 = scmp.eq.s32.totalorder %s19, 1
      %p56 = por %p54, %p55
      %p58 = scmp.ne.s32.totalorder %s41, %s57
      %p59 = scmp.eq.s32.totalorder %s19, 0
      %p60 = por %p58, %p59
      %s62 = sadd.s32 %s61, 1
      %p65 = scmp.eq.s32.totalorder %s13, 1
      %p66 = scmp.ne.s32.totalorder %s61, %s63
      %p67 = scmp.eq.s32.totalorder %s13, 0
      %p68 = por %p66, %p67
      %p69 = scmp.ne.s32.totalorder %s61, %s63
      %p70 = scmp.eq.s32.totalorder %s18, 1
      %p71 = por %p69, %p70
      %p72 = scmp.ne.s32.totalorder %s63, %s64
      %p73 = scmp.eq.s32.totalorder %s18, 0
      %p74 = por %p72, %p73
      %p75 = scmp.ne.s32.totalorder %s63, %s64
      %p76 = scmp.eq.s32.totalorder %s19, 1
      %p77 = por %p75, %p76
      %p79 = scmp.ne.s32.totalorder %s64, %s78
      %p80 = scmp.eq.s32.totalorder %s19, 0
      %p81 = por %p79, %p80
      %s83 = sadd.s32 %s82, 1
      %p86 = scmp.eq.s32.totalorder %s13, 1
      %p87 = scmp.ne.s32.totalorder %s82, %s84
      %p88 = scmp.eq.s32.totalorder %s13, 0
      %p89 = por %p87, %p88
      %p90 = scmp.ne.s32.totalorder %s82, %s84
      %p91 = scmp.eq.s32.totalorder %s18, 1
      %p92 = por %p90, %p91
      %p93 = scmp.ne.s32.totalorder %s84, %s85
      %p94 = scmp.eq.s32.totalorder %s18, 0
      %p95 = por %p93, %p94
      %p96 = scmp.ne.s32.totalorder %s84, %s85
      %p97 = scmp.eq.s32.totalorder %s19, 1
      %p98 = por %p96, %p97
      %p100 = scmp.ne.s32.totalorder %s85, %s99
      %p101 = scmp.eq.s32.totalorder %s19, 0
      %p102 = por %p100, %p101
      %s103 = ssub.s32 %s20, %s32
      %s104 = ssub.s32 %s21, %s28
      %s105 = sor.u32 %s103, %s104
      %p106 = scmp.eq.s32.totalorder %s105, 0
      %s108 = sadd.s32 %s107, 1
      %s109 = scalar_select %p106, %s107, %s108
      %p112 = pneg %p106
      %p113 = scmp.eq.s32.totalorder %s13, 1
      %p114 = por %p112, %p113
      %p115 = scmp.ne.s32.totalorder %s107, %s110
      %p116 = scmp.eq.s32.totalorder %s13, 0
      %p117 = por %p115, %p116
      %p118 = scmp.ne.s32.totalorder %s107, %s110
      %p119 = scmp.eq.s32.totalorder %s18, 1
      %p120 = por %p118, %p119
      %p121 = scmp.ne.s32.totalorder %s110, %s111
      %p122 = scmp.eq.s32.totalorder %s18, 0
      %p123 = por %p121, %p122
      %p124 = scmp.ne.s32.totalorder %s110, %s111
      %p125 = scmp.eq.s32.totalorder %s19, 1
      %p126 = por %p124, %p125
      %p128 = scmp.ne.s32.totalorder %s111, %s127
      %p129 = scmp.eq.s32.totalorder %s19, 0
      %p130 = por %p128, %p129
      %p131 = scmp.le.s32.totalorder 1, %s13
      %p132 = scmp.lt.s32.totalorder %s13, 3
      %p133 = pnand %p131, %p132
      %p134 = pneg %p133
      // Predicated region
      $region9: #{tpu_custom_call.1} parent=5 // pred_check
        _
      $region10: #{tpu_custom_call.1} parent=5 // pred_check_branch
        %136 = sbr.rel (%p133) target = $region12
      $region11: #{tpu_custom_call.1} parent=5 // pred_region
        %s137 = ssub.s32 %s13, 1
        // Predicated region
        $region13: #{tpu_custom_call.1} parent=11 // pred_check
          %p138 = pneg %p74
        $region14: #{tpu_custom_call.1} parent=11 // pred_check_branch
          %140 = sbr.rel (%p138) target = $region16
        $region15: #{tpu_custom_call.1} parent=11 // pred_region
          %s142 = ssub.s32 3072, 3072
          %143 = vsyncadd [#allocation5], %s142
          %s144 = sshll.u32 [#allocation4], 4
          %s145 = int_to_ptr.vmem [resolvable:$true] %s144
          %150 = dma.hbm_to_vmem [thread:$0]  %s1, 3072, %s145, [#allocation5], 64, 64, 4
        $region16: #{tpu_custom_call.1} parent=11 // pred_fallthru
          _
        // Predicated region
        $region17: #{tpu_custom_call.1} parent=11 // pred_check
          %p151 = pneg %p95
        $region18: #{tpu_custom_call.1} parent=11 // pred_check_branch
          %153 = sbr.rel (%p151) target = $region20
        $region19: #{tpu_custom_call.1} parent=11 // pred_region
          _
        $region20: #{tpu_custom_call.1} parent=11 // pred_fallthru
          _
      $region12: #{tpu_custom_call.1} parent=5 // pred_fallthru
        _
      %p154 = scmp.lt.s32.totalorder %s13, 2
      // Predicated region
      $region21: #{tpu_custom_call.1} parent=5 // pred_check
        %p155 = pneg %p154
      $region22: #{tpu_custom_call.1} parent=5 // pred_check_branch
        %157 = sbr.rel (%p155) target = $region24
      $region23: #{tpu_custom_call.1} parent=5 // pred_region
        // Predicated region
        $region25: #{tpu_custom_call.1} parent=23 // pred_check
          %p158 = pneg %p47
        $region26: #{tpu_custom_call.1} parent=23 // pred_check_branch
          %160 = sbr.rel (%p158) target = $region28
        $region27: #{tpu_custom_call.1} parent=23 // pred_region
          %s161 = sand.u32 %s37, 1
          %s162 = scalar_lea.sflag [#allocation3], %s161
          %s163 = sand.u32 %s37, 1
          %s164 = smul.addr %s163, 84
          %s165 = scalar_lea.vmem [#allocation2], %s164
          %s167 = ssub.s32 1344, 1344
          %168 = vsyncadd %s162, %s167
          %s169 = smul.addr %s21, 21
          %s170 = smul.addr %s20, 21
          %s171 = sadd.s32 %s169, %s170
          %s172 = smul.addr %s171, 64
          %s173 = scalar_lea.hbm %s0, %s172
          %s174 = sshll.u32 %s165, 4
          %s175 = int_to_ptr.vmem [resolvable:$true] %s174
          %180 = dma.hbm_to_vmem [thread:$0]  %s173, 1344, %s175, %s162, 192, 192, 12
        $region28: #{tpu_custom_call.1} parent=23 // pred_fallthru
          _
      $region24: #{tpu_custom_call.1} parent=5 // pred_fallthru
        _
      %p181 = scmp.le.s32.totalorder 1, %s13
      %p182 = scmp.lt.s32.totalorder %s13, 3
      %p183 = pnand %p181, %p182
      %p184 = pneg %p183
      // Predicated region
      $region29: #{tpu_custom_call.1} parent=5 // pred_check
        _
      $region30: #{tpu_custom_call.1} parent=5 // pred_check_branch
        %186 = sbr.rel (%p183) target = $region32
      $region31: #{tpu_custom_call.1} parent=5 // pred_region
        %s187 = ssub.s32 %s13, 1
        %s188 = sand.u32 %s40, 1
        %s189 = scalar_lea.sflag [#allocation3], %s188
        %s190 = sand.u32 %s40, 1
        %s191 = smul.addr %s190, 84
        %s192 = scalar_lea.vmem [#allocation2], %s191
        // Predicated region
        $region33: #{tpu_custom_call.1} parent=31 // pred_check
          %p193 = pneg %p53
        $region34: #{tpu_custom_call.1} parent=31 // pred_check_branch
          %195 = sbr.rel (%p193) target = $region36
        $region35: #{tpu_custom_call.1} parent=31 // pred_region
          %196 = dma.done %s189, 1344
        $region36: #{tpu_custom_call.1} parent=31 // pred_fallthru
          _
        // Predicated region
        $region37: #{tpu_custom_call.1} parent=31 // pred_check
          %p197 = pneg %p74
        $region38: #{tpu_custom_call.1} parent=31 // pred_check_branch
          %199 = sbr.rel (%p197) target = $region40
        $region39: #{tpu_custom_call.1} parent=31 // pred_region
          %200 = dma.done [#allocation5], 3072
        $region40: #{tpu_custom_call.1} parent=31 // pred_fallthru
          _
        %s201 = sand.u32 %s40, 1
        %s202 = scalar_lea.sflag [#allocation3], %s201
        %s203 = sand.u32 %s40, 1
        %s204 = smul.addr %s203, 84
        %s205 = scalar_lea.vmem [#allocation2], %s204
        %p206 = pneg %p53
        %p207 = pneg %p50
        %p208 = pneg %p74
        %p209 = pneg %p71
        %p210 = pneg %p95
        %p211 = pneg %p92
        %p212 = pneg %p123
        %p213 = pneg %p120
        %s214 = smul.u32 3, %s23
        %p215 = scmp.lt.s32.totalorder %s22, 1
        %s216 = scalar_select %p215, %s22, 1
        %p217 = scmp.lt.s32.totalorder %s214, 2
        %s218 = scalar_select %p217, %s214, 2
        %s219 = smul.addr %s216, 3
        %s220 = sadd.s32 %s218, %s219
        %s221 = smul.addr %s220, 8
        %s222 = scalar_lea.vmem %s3, %s221
        %s223 = smul.u32 3, %s23
        %p224 = scmp.lt.s32.totalorder %s22, 1
        %s225 = scalar_select %p224, %s22, 1
        %p226 = scmp.lt.s32.totalorder %s223, 2
        %s227 = scalar_select %p226, %s223, 2
        %s228 = smul.addr %s225, 3
        %s229 = sadd.s32 %s227, %s228
        %s230 = smul.addr %s229, 8
        %s231 = scalar_lea.vmem %s3, %s230
        %s232 = smul.u32 3, %s23
        %v234 = vld [vmem:[%s192] sm:$0xff]
        %v235 = vld [vmem:[%s192 + $0x8] sm:$0xf]
        %v236 = vld [vmem:[%s192 + $0xc] sm:$0xff]
        %v237 = vld [vmem:[%s192 + $0x14] sm:$0xf]
        %v238 = vld [vmem:[%s192 + $0x18] sm:$0xff]
        %v239 = vld [vmem:[%s192 + $0x20] sm:$0xf]
        %v240 = vld [vmem:[%s192 + $0x24] sm:$0xff]
        %v241 = vld [vmem:[%s192 + $0x2c] sm:$0xf]
        %v242 = vld [vmem:[%s192 + $0x30] sm:$0xff]
        %v243 = vld [vmem:[%s192 + $0x38] sm:$0xf]
        %v244 = vld [vmem:[%s192 + $0x3c] sm:$0xff]
        %v245 = vld [vmem:[%s192 + $0x44] sm:$0xf]
        %v246 = vld [vmem:[%s192 + $0x48] sm:$0xff]
        %v247 = vld [vmem:[%s192 + $0x50] sm:$0xf]
        %v248 = vld [vmem:[#allocation4] sm:$0xf]
        %v249 = vld [vmem:[#allocation4 + $0x4] sm:$0xf]
        %v250 = vld [vmem:[#allocation4 + $0x8] sm:$0xf]
        %v251 = vld [vmem:[#allocation4 + $0xc] sm:$0xf]
        %v252 = vld [vmem:[#allocation4 + $0x10] sm:$0xf]
        %v253 = vld [vmem:[#allocation4 + $0x14] sm:$0xf]
        %v254 = vld [vmem:[#allocation4 + $0x18] sm:$0xf]
        %v255 = vld [vmem:[#allocation4 + $0x1c] sm:$0xf]
        %v256 = vld [vmem:[#allocation4 + $0x20] sm:$0xf]
        %v257 = vld [vmem:[#allocation4 + $0x24] sm:$0xf]
        %v258 = vld [vmem:[#allocation4 + $0x28] sm:$0xf]
        %v259 = vld [vmem:[#allocation4 + $0x2c] sm:$0xf]
        %v260 = vld [vmem:[#allocation4 + $0x30] sm:$0xf]
        %v261 = vld [vmem:[#allocation4 + $0x34] sm:$0xf]
        %v262 = vld [vmem:[#allocation4 + $0x38] sm:$0xf]
        %v263 = vld [vmem:[#allocation4 + $0x3c] sm:$0xf]
        %v264 = vld [vmem:[#allocation4 + $0x40] sm:$0xf]
        %v265 = vld [vmem:[#allocation4 + $0x44] sm:$0xf]
        %v266 = vld [vmem:[#allocation4 + $0x48] sm:$0xf]
        %v267 = vld [vmem:[#allocation4 + $0x4c] sm:$0xf]
        %v268 = vld [vmem:[#allocation4 + $0x50] sm:$0xf]
        %v269 = vld [vmem:[#allocation4 + $0x54] sm:$0xf]
        %v270 = vld [vmem:[#allocation4 + $0x58] sm:$0xf]
        %v271 = vld [vmem:[#allocation4 + $0x5c] sm:$0xf]
        %v272 = vld [vmem:[#allocation4 + $0x60] sm:$0xf]
        %v273 = vld [vmem:[#allocation4 + $0x64] sm:$0xf]
        %v274 = vld [vmem:[#allocation4 + $0x68] sm:$0xf]
        %v275 = vld [vmem:[#allocation4 + $0x6c] sm:$0xf]
        %v276 = vld [vmem:[#allocation4 + $0x70] sm:$0xf]
        %v277 = vld [vmem:[#allocation4 + $0x74] sm:$0xf]
        %v278 = vld [vmem:[#allocation4 + $0x78] sm:$0xf]
        %v279 = vld [vmem:[#allocation4 + $0x7c] sm:$0xf]
        %v280 = vld [vmem:[#allocation4 + $0x80] sm:$0xf]
        %v281 = vld [vmem:[#allocation4 + $0x84] sm:$0xf]
        %v282 = vld [vmem:[#allocation4 + $0x88] sm:$0xf]
        %v283 = vld [vmem:[#allocation4 + $0x8c] sm:$0xf]
        %v284 = vld [vmem:[#allocation4 + $0x90] sm:$0xf]
        %v285 = vld [vmem:[#allocation4 + $0x94] sm:$0xf]
        %v286 = vld [vmem:[#allocation4 + $0x98] sm:$0xf]
        %v287 = vld [vmem:[#allocation4 + $0x9c] sm:$0xf]
        %v288 = vld [vmem:[#allocation4 + $0xa0] sm:$0xf]
        %v289 = vld [vmem:[#allocation4 + $0xa4] sm:$0xf]
        %v290 = vld [vmem:[#allocation4 + $0xa8] sm:$0xf]
        %v291 = vld [vmem:[#allocation4 + $0xac] sm:$0xf]
        %v292 = vld [vmem:[#allocation4 + $0xb0] sm:$0xf]
        %v293 = vld [vmem:[#allocation4 + $0xb4] sm:$0xf]
        %v294 = vld [vmem:[#allocation4 + $0xb8] sm:$0xf]
        %v295 = vld [vmem:[#allocation4 + $0xbc] sm:$0xf]
        %v296 = vld [vmem:[%s2] sm:$0x1]
        %v298 = vlaneseq
        %v299 = vshrl.u32 %v298, 7
        %v300 = vsub.s32 0, %v299
        %v301 = vrot.slane %v296, %v300
        %v317 = vunpack.c.l.b16 %v234
        %v318 = vunpack.c.h.b16 %v234
        %v319 = vunpack.c.l.b16 %v235
        %v320 = vunpack.c.l.b16 %v236
        %v321 = vunpack.c.h.b16 %v236
        %v322 = vunpack.c.l.b16 %v237
        %v323 = vunpack.c.l.b16 %v238
        %v324 = vunpack.c.h.b16 %v238
        %v325 = vunpack.c.l.b16 %v239
        %v326 = vunpack.c.l.b16 %v240
        %v327 = vunpack.c.h.b16 %v240
        %v328 = vunpack.c.l.b16 %v241
        %v329 = vunpack.c.l.b16 %v242
        %v330 = vunpack.c.h.b16 %v242
        %v331 = vunpack.c.l.b16 %v243
        %v332 = vunpack.c.l.b16 %v244
        %v333 = vunpack.c.h.b16 %v244
        %v334 = vunpack.c.l.b16 %v245
        %v335 = vunpack.c.l.b16 %v246
        %v336 = vunpack.c.h.b16 %v246
        %v337 = vunpack.c.l.b16 %v247
        %v338 = vpack.c.b16 %v320, %v317
        %v339 = vpack.c.b16 %v321, %v318
        %v340 = vpack.c.b16 %v322, %v319
        %v341 = vpack.c.b16 %v326, %v323
        %v342 = vpack.c.b16 %v327, %v324
        %v343 = vpack.c.b16 %v328, %v325
        %v344 = vpack.c.b16 %v332, %v329
        %v345 = vpack.c.b16 %v333, %v330
        %v346 = vpack.c.b16 %v334, %v331
        %v347 = vpack.c.b16 %v335, %v335
        %v348 = vpack.c.b16 %v336, %v336
        %v349 = vpack.c.b16 %v337, %v337
        %v410 = vunpack.c.l.b16 %v248
        %v411 = vunpack.c.l.b16 %v249
        %v412 = vunpack.c.l.b16 %v250
        %v413 = vunpack.c.l.b16 %v251
        %v414 = vunpack.c.l.b16 %v252
        %v415 = vunpack.c.l.b16 %v253
        %v416 = vunpack.c.l.b16 %v254
        %v417 = vunpack.c.l.b16 %v255
        %v418 = vunpack.c.l.b16 %v256
        %v419 = vunpack.c.l.b16 %v257
        %v420 = vunpack.c.l.b16 %v258
        %v421 = vunpack.c.l.b16 %v259
        %v422 = vunpack.c.l.b16 %v260
        %v423 = vunpack.c.l.b16 %v261
        %v424 = vunpack.c.l.b16 %v262
        %v425 = vunpack.c.l.b16 %v263
        %v426 = vunpack.c.l.b16 %v264
        %v427 = vunpack.c.l.b16 %v265
        %v428 = vunpack.c.l.b16 %v266
        %v429 = vunpack.c.l.b16 %v267
        %v430 = vunpack.c.l.b16 %v268
        %v431 = vunpack.c.l.b16 %v269
        %v432 = vunpack.c.l.b16 %v270
        %v433 = vunpack.c.l.b16 %v271
        %v434 = vunpack.c.l.b16 %v272
        %v435 = vunpack.c.l.b16 %v273
        %v436 = vunpack.c.l.b16 %v274
        %v437 = vunpack.c.l.b16 %v275
        %v438 = vunpack.c.l.b16 %v276
        %v439 = vunpack.c.l.b16 %v277
        %v440 = vunpack.c.l.b16 %v278
        %v441 = vunpack.c.l.b16 %v279
        %v442 = vunpack.c.l.b16 %v280
        %v443 = vunpack.c.l.b16 %v281
        %v444 = vunpack.c.l.b16 %v282
        %v445 = vunpack.c.l.b16 %v283
        %v446 = vunpack.c.l.b16 %v284
        %v447 = vunpack.c.l.b16 %v285
        %v448 = vunpack.c.l.b16 %v286
        %v449 = vunpack.c.l.b16 %v287
        %v450 = vunpack.c.l.b16 %v288
        %v451 = vunpack.c.l.b16 %v289
        %v452 = vunpack.c.l.b16 %v290
        %v453 = vunpack.c.l.b16 %v291
        %v454 = vunpack.c.l.b16 %v292
        %v455 = vunpack.c.l.b16 %v293
        %v456 = vunpack.c.l.b16 %v294
        %v457 = vunpack.c.l.b16 %v295
        %v458 = vpack.c.b16 %v411, %v410
        %v459 = vpack.c.b16 %v413, %v412
        %v460 = vpack.c.b16 %v415, %v414
        %v461 = vpack.c.b16 %v417, %v416
        %v462 = vpack.c.b16 %v419, %v418
        %v463 = vpack.c.b16 %v421, %v420
        %v464 = vpack.c.b16 %v423, %v422
        %v465 = vpack.c.b16 %v425, %v424
        %v466 = vpack.c.b16 %v427, %v426
        %v467 = vpack.c.b16 %v429, %v428
        %v468 = vpack.c.b16 %v431, %v430
        %v469 = vpack.c.b16 %v433, %v432
        %v470 = vpack.c.b16 %v435, %v434
        %v471 = vpack.c.b16 %v437, %v436
        %v472 = vpack.c.b16 %v439, %v438
        %v473 = vpack.c.b16 %v441, %v440
        %v474 = vpack.c.b16 %v443, %v442
        %v475 = vpack.c.b16 %v445, %v444
        %v476 = vpack.c.b16 %v447, %v446
        %v477 = vpack.c.b16 %v449, %v448
        %v478 = vpack.c.b16 %v451, %v450
        %v479 = vpack.c.b16 %v453, %v452
        %v480 = vpack.c.b16 %v455, %v454
        %v481 = vpack.c.b16 %v457, %v456
        %506 = vmatprep.subr.bf16.mxu0 0
        %507 = vmatpush1.bf16.msra.mxu0 %v458
        %508 = vmatprep.subr.bf16.mxu0 0
        %509 = vmatpush1.bf16.msra.mxu0 %v459
        %510 = vmatprep.subr.bf16.mxu0 0
        %511 = vmatpush1.bf16.msra.mxu0 %v460
        %512 = vmatprep.subr.bf16.mxu0 0
        %513 = vmatpush1.bf16.msra.mxu0 %v461
        %514 = vmatprep.subr.bf16.mxu0 0
        %515 = vmatpush1.bf16.msra.mxu0 %v462
        %516 = vmatprep.subr.bf16.mxu0 0
        %517 = vmatpush1.bf16.msra.mxu0 %v463
        %518 = vmatprep.subr.bf16.mxu0 0
        %519 = vmatpush1.bf16.msra.mxu0 %v464
        %520 = vmatprep.subr.bf16.mxu0 0
        %521 = vmatpush1.bf16.msra.mxu0 %v465
        %522 = vmatprep.subr.bf16.mxu0 0
        %523 = vmatpush1.bf16.msra.mxu0 %v466
        %524 = vmatprep.subr.bf16.mxu0 0
        %525 = vmatpush1.bf16.msra.mxu0 %v467
        %526 = vmatprep.subr.bf16.mxu0 0
        %527 = vmatpush1.bf16.msra.mxu0 %v468
        %528 = vmatprep.subr.bf16.mxu0 0
        %529 = vmatpush1.bf16.msra.mxu0 %v469
        %530 = vmatprep.subr.bf16.mxu0 0
        %531 = vmatpush1.bf16.msra.mxu0 %v470
        %532 = vmatprep.subr.bf16.mxu0 0
        %533 = vmatpush1.bf16.msra.mxu0 %v471
        %534 = vmatprep.subr.bf16.mxu0 0
        %535 = vmatpush1.bf16.msra.mxu0 %v472
        %536 = vmatprep.subr.bf16.mxu0 0
        %537 = vmatpush1.bf16.msra.mxu0 %v473
        %538 = vmatprep.mubr.bf16.mxu0 %v339
        %539 = vmatmul.mubr.bf16.gmra.mrb[0].mxu0 %v338
        %v540 = vpop.f32.mrb[0].mxu0
        %v541 = vadd.f32 %v301, %v540
        %v542 = vpop.f32.mrb[0].mxu0
        %v543 = vpop.f32.mrb[0].mxu0
        %v544 = vadd.f32 %v301, %v543
        %v545 = vpop.f32.mrb[0].mxu0
        %546 = vmatprep.mubr.bf16.mxu0 %v342
        %547 = vmatmul.mubr.bf16.gmra.mrb[0].mxu0 %v341
        %v548 = vpop.f32.mrb[0].mxu0
        %v549 = vadd.f32 %v301, %v548
        %v550 = vpop.f32.mrb[0].mxu0
        %v551 = vpop.f32.mrb[0].mxu0
        %v552 = vadd.f32 %v301, %v551
        %v553 = vpop.f32.mrb[0].mxu0
        %554 = vmatprep.mubr.bf16.mxu0 %v345
        %555 = vmatmul.mubr.bf16.gmra.mrb[0].mxu0 %v344
        %v556 = vpop.f32.mrb[0].mxu0
        %v557 = vadd.f32 %v301, %v556
        %v558 = vpop.f32.mrb[0].mxu0
        %v559 = vpop.f32.mrb[0].mxu0
        %v560 = vadd.f32 %v301, %v559
        %v561 = vpop.f32.mrb[0].mxu0
        %562 = vmatprep.mubr.bf16.mxu0 %v348
        %563 = vmatmul.mubr.bf16.gmra.mrb[0].mxu0 %v347
        %v564 = vpop.f32.mrb[0].mxu0
        %v565 = vadd.f32 %v301, %v564
        %v566 = vpop.f32.mrb[0].mxu0
        %v567 = vpop.f32.mrb[0].mxu0
        %v568 = vpop.f32.mrb[0].mxu0
        %569 = vdwg.mxu0
        %570 = vmatprep.subr.bf16.mxu0 0
        %571 = vmatpush1.bf16.msra.mxu0 %v474
        %572 = vmatprep.subr.bf16.mxu0 0
        %573 = vmatpush1.bf16.msra.mxu0 %v475
        %574 = vmatprep.subr.bf16.mxu0 0
        %575 = vmatpush1.bf16.msra.mxu0 %v476
        %576 = vmatprep.subr.bf16.mxu0 0
        %577 = vmatpush1.bf16.msra.mxu0 %v477
        %578 = vmatprep.subr.bf16.mxu0 0
        %579 = vmatpush1.bf16.msra.mxu0 %v478
        %580 = vmatprep.subr.bf16.mxu0 0
        %581 = vmatpush1.bf16.msra.mxu0 %v479
        %582 = vmatprep.subr.bf16.mxu0 0
        %583 = vmatpush1.bf16.msra.mxu0 %v480
        %584 = vmatprep.subr.bf16.mxu0 0
        %585 = vmatpush1.bf16.msra.mxu0 %v481
        %586 = vmatprep.subr.bf16.mxu0 0
        %587 = vmatpush1.bf16.msra.mxu0 0
        %588 = vmatprep.subr.bf16.mxu0 0
        %589 = vmatpush1.bf16.msra.mxu0 0
        %590 = vmatprep.subr.bf16.mxu0 0
        %591 = vmatpush1.bf16.msra.mxu0 0
        %592 = vmatprep.subr.bf16.mxu0 0
        %593 = vmatpush1.bf16.msra.mxu0 0
        %594 = vmatprep.subr.bf16.mxu0 0
        %595 = vmatpush1.bf16.msra.mxu0 0
        %596 = vmatprep.subr.bf16.mxu0 0
        %597 = vmatpush1.bf16.msra.mxu0 0
        %598 = vmatprep.subr.bf16.mxu0 0
        %599 = vmatpush1.bf16.msra.mxu0 0
        %600 = vmatprep.subr.bf16.mxu0 0
        %601 = vmatpush1.bf16.msra.mxu0 0
        %602 = vmatprep.mubr.bf16.mxu0 0
        %603 = vmatmul.mubr.bf16.gmra.mrb[0].mxu0 %v340
        %v604 = vpop.f32.mrb[0].mxu0
        %v605 = vadd.f32 %v541, %v604
        %v606 = vpop.f32.mrb[0].mxu0
        %v607 = vpop.f32.mrb[0].mxu0
        %v608 = vadd.f32 %v544, %v607
        %v609 = vpop.f32.mrb[0].mxu0
        %610 = vmatprep.mubr.bf16.mxu0 0
        %611 = vmatmul.mubr.bf16.gmra.mrb[0].mxu0 %v343
        %v612 = vpop.f32.mrb[0].mxu0
        %v613 = vadd.f32 %v549, %v612
        %v614 = vpop.f32.mrb[0].mxu0
        %v615 = vpop.f32.mrb[0].mxu0
        %v616 = vadd.f32 %v552, %v615
        %v617 = vpop.f32.mrb[0].mxu0
        %618 = vmatprep.mubr.bf16.mxu0 0
        %619 = vmatmul.mubr.bf16.gmra.mrb[0].mxu0 %v346
        %v620 = vpop.f32.mrb[0].mxu0
        %v621 = vadd.f32 %v557, %v620
        %v622 = vpop.f32.mrb[0].mxu0
        %v623 = vpop.f32.mrb[0].mxu0
        %v624 = vadd.f32 %v560, %v623
        %v625 = vpop.f32.mrb[0].mxu0
        %626 = vmatprep.mubr.bf16.mxu0 0
        %627 = vmatmul.mubr.bf16.gmra.mrb[0].mxu0 %v349
        %v628 = vpop.f32.mrb[0].mxu0
        %v629 = vadd.f32 %v565, %v628
        %v630 = vpop.f32.mrb[0].mxu0
        %v631 = vpop.f32.mrb[0].mxu0
        %v632 = vpop.f32.mrb[0].mxu0
        %633 = vdwg.mxu0
        %v634 = vmax.f32 %v605, 0.0
        %v635 = vmax.f32 %v608, 0.0
        %v636 = vmax.f32 %v613, 0.0
        %v637 = vmax.f32 %v616, 0.0
        %v638 = vmax.f32 %v621, 0.0
        %v639 = vmax.f32 %v624, 0.0
        %v640 = vmax.f32 %v629, 0.0
        %v641 = vmul.f32 %v634, %v634
        %v642 = vmul.f32 %v635, %v635
        %v643 = vmul.f32 %v636, %v636
        %v644 = vmul.f32 %v637, %v637
        %v645 = vmul.f32 %v638, %v638
        %v646 = vmul.f32 %v639, %v639
        %v647 = vmul.f32 %v640, %v640
        %648 = vrot.lane.b32.xlu0 %v641, 1
        %v649 = vpop.permute.xlu0 %648
        %650 = vrot.lane.b32.xlu0 %v642, 1
        %v651 = vpop.permute.xlu0 %650
        %652 = vrot.lane.b32.xlu0 %v643, 1
        %v653 = vpop.permute.xlu0 %652
        %654 = vrot.lane.b32.xlu0 %v644, 1
        %v655 = vpop.permute.xlu0 %654
        %656 = vrot.lane.b32.xlu0 %v645, 1
        %v657 = vpop.permute.xlu0 %656
        %658 = vrot.lane.b32.xlu0 %v646, 1
        %v659 = vpop.permute.xlu0 %658
        %660 = vrot.lane.b32.xlu0 %v647, 1
        %v661 = vpop.permute.xlu0 %660
        %v662 = vadd.f32 %v641, %v649
        %v663 = vadd.f32 %v642, %v651
        %v664 = vadd.f32 %v643, %v653
        %v665 = vadd.f32 %v644, %v655
        %v666 = vadd.f32 %v645, %v657
        %v667 = vadd.f32 %v646, %v659
        %v668 = vadd.f32 %v647, %v661
        %669 = vrot.lane.b32.xlu0 %v641, 127
        %v670 = vpop.permute.xlu0 %669
        %671 = vrot.lane.b32.xlu0 %v642, 127
        %v672 = vpop.permute.xlu0 %671
        %673 = vrot.lane.b32.xlu0 %v643, 127
        %v674 = vpop.permute.xlu0 %673
        %675 = vrot.lane.b32.xlu0 %v644, 127
        %v676 = vpop.permute.xlu0 %675
        %677 = vrot.lane.b32.xlu0 %v645, 127
        %v678 = vpop.permute.xlu0 %677
        %679 = vrot.lane.b32.xlu0 %v646, 127
        %v680 = vpop.permute.xlu0 %679
        %681 = vrot.lane.b32.xlu0 %v647, 127
        %v682 = vpop.permute.xlu0 %681
        %v683 = vadd.f32 %v662, %v670
        %v684 = vadd.f32 %v663, %v672
        %v685 = vadd.f32 %v664, %v674
        %v686 = vadd.f32 %v665, %v676
        %v687 = vadd.f32 %v666, %v678
        %v688 = vadd.f32 %v667, %v680
        %v689 = vadd.f32 %v668, %v682
        %690 = vrot.lane.b32.xlu0 %v641, 2
        %v691 = vpop.permute.xlu0 %690
        %692 = vrot.lane.b32.xlu0 %v642, 2
        %v693 = vpop.permute.xlu0 %692
        %694 = vrot.lane.b32.xlu0 %v643, 2
        %v695 = vpop.permute.xlu0 %694
        %696 = vrot.lane.b32.xlu0 %v644, 2
        %v697 = vpop.permute.xlu0 %696
        %698 = vrot.lane.b32.xlu0 %v645, 2
        %v699 = vpop.permute.xlu0 %698
        %700 = vrot.lane.b32.xlu0 %v646, 2
        %v701 = vpop.permute.xlu0 %700
        %702 = vrot.lane.b32.xlu0 %v647, 2
        %v703 = vpop.permute.xlu0 %702
        %v704 = vadd.f32 %v683, %v691
        %v705 = vadd.f32 %v684, %v693
        %v706 = vadd.f32 %v685, %v695
        %v707 = vadd.f32 %v686, %v697
        %v708 = vadd.f32 %v687, %v699
        %v709 = vadd.f32 %v688, %v701
        %v710 = vadd.f32 %v689, %v703
        %711 = vrot.lane.b32.xlu0 %v641, 126
        %v712 = vpop.permute.xlu0 %711
        %713 = vrot.lane.b32.xlu0 %v642, 126
        %v714 = vpop.permute.xlu0 %713
        %715 = vrot.lane.b32.xlu0 %v643, 126
        %v716 = vpop.permute.xlu0 %715
        %717 = vrot.lane.b32.xlu0 %v644, 126
        %v718 = vpop.permute.xlu0 %717
        %719 = vrot.lane.b32.xlu0 %v645, 126
        %v720 = vpop.permute.xlu0 %719
        %721 = vrot.lane.b32.xlu0 %v646, 126
        %v722 = vpop.permute.xlu0 %721
        %723 = vrot.lane.b32.xlu0 %v647, 126
        %v724 = vpop.permute.xlu0 %723
        %v725 = vadd.f32 %v704, %v712
        %v726 = vadd.f32 %v705, %v714
        %v727 = vadd.f32 %v706, %v716
        %v728 = vadd.f32 %v707, %v718
        %v729 = vadd.f32 %v708, %v720
        %v730 = vadd.f32 %v709, %v722
        %v731 = vadd.f32 %v710, %v724
        %v732 = vmul.f32 %v725, 2e-05
        %v733 = vmul.f32 %v726, 2e-05
        %v734 = vmul.f32 %v727, 2e-05
        %v735 = vmul.f32 %v728, 2e-05
        %v736 = vmul.f32 %v729, 2e-05
        %v737 = vmul.f32 %v730, 2e-05
        %v738 = vmul.f32 %v731, 2e-05
        %v739 = vadd.f32 %v732, 2.0
        %v740 = vadd.f32 %v733, 2.0
        %v741 = vadd.f32 %v734, 2.0
        %v742 = vadd.f32 %v735, 2.0
        %v743 = vadd.f32 %v736, 2.0
        %v744 = vadd.f32 %v737, 2.0
        %v745 = vadd.f32 %v738, 2.0
        %v746 = vrsqrt.pop %v739
        %v747 = vrsqrt.pop %v740
        %v748 = vrsqrt.pop %v741
        %v749 = vrsqrt.pop %v742
        %v750 = vrsqrt.pop %v743
        %v751 = vrsqrt.pop %v744
        %v752 = vrsqrt.pop %v745
        %v753 = vrsqrt.pop %v746
        %v754 = vmul.f32 %v746, %v753
        %vm755 = vcmp.eq.f32.partialorder %v746, inf
        %v756 = vsel %vm755, %v746, %v754
        %vm757 = vcmp.eq.f32.partialorder %v746, 0.0
        %v758 = vand.u32 %v746, 2147483648
        %v759 = vsel %vm757, %v758, %v756
        %v760 = vrsqrt.pop %v747
        %v761 = vmul.f32 %v747, %v760
        %vm762 = vcmp.eq.f32.partialorder %v747, inf
        %v763 = vsel %vm762, %v747, %v761
        %vm764 = vcmp.eq.f32.partialorder %v747, 0.0
        %v765 = vand.u32 %v747, 2147483648
        %v766 = vsel %vm764, %v765, %v763
        %v767 = vrsqrt.pop %v748
        %v768 = vmul.f32 %v748, %v767
        %vm769 = vcmp.eq.f32.partialorder %v748, inf
        %v770 = vsel %vm769, %v748, %v768
        %vm771 = vcmp.eq.f32.partialorder %v748, 0.0
        %v772 = vand.u32 %v748, 2147483648
        %v773 = vsel %vm771, %v772, %v770
        %v774 = vrsqrt.pop %v749
        %v775 = vmul.f32 %v749, %v774
        %vm776 = vcmp.eq.f32.partialorder %v749, inf
        %v777 = vsel %vm776, %v749, %v775
        %vm778 = vcmp.eq.f32.partialorder %v749, 0.0
        %v779 = vand.u32 %v749, 2147483648
        %v780 = vsel %vm778, %v779, %v777
        %v781 = vrsqrt.pop %v750
        %v782 = vmul.f32 %v750, %v781
        %vm783 = vcmp.eq.f32.partialorder %v750, inf
        %v784 = vsel %vm783, %v750, %v782
        %vm785 = vcmp.eq.f32.partialorder %v750, 0.0
        %v786 = vand.u32 %v750, 2147483648
        %v787 = vsel %vm785, %v786, %v784
        %v788 = vrsqrt.pop %v751
        %v789 = vmul.f32 %v751, %v788
        %vm790 = vcmp.eq.f32.partialorder %v751, inf
        %v791 = vsel %vm790, %v751, %v789
        %vm792 = vcmp.eq.f32.partialorder %v751, 0.0
        %v793 = vand.u32 %v751, 2147483648
        %v794 = vsel %vm792, %v793, %v791
        %v795 = vrsqrt.pop %v752
        %v796 = vmul.f32 %v752, %v795
        %vm797 = vcmp.eq.f32.partialorder %v752, inf
        %v798 = vsel %vm797, %v752, %v796
        %vm799 = vcmp.eq.f32.partialorder %v752, 0.0
        %v800 = vand.u32 %v752, 2147483648
        %v801 = vsel %vm799, %v800, %v798
        %v802 = vmul.f32 %v746, %v759
        %v803 = vmul.f32 %v747, %v766
        %v804 = vmul.f32 %v748, %v773
        %v805 = vmul.f32 %v749, %v780
        %v806 = vmul.f32 %v750, %v787
        %v807 = vmul.f32 %v751, %v794
        %v808 = vmul.f32 %v752, %v801
        %v809 = vmul.f32 %v634, %v802
        %v810 = vmul.f32 %v635, %v803
        %v811 = vmul.f32 %v636, %v804
        %v812 = vmul.f32 %v637, %v805
        %v813 = vmul.f32 %v638, %v806
        %v814 = vmul.f32 %v639, %v807
        %v815 = vmul.f32 %v640, %v808
        %v816 = vmax.f32 %v809, %v810
        %v817 = vmax.f32 %v811, %v812
        %v818 = vmax.f32 %v813, %v814
        %v819 = vmax.f32 %v816, %v811
        %v820 = vmax.f32 %v817, %v813
        %v821 = vmax.f32 %v818, %v815
        %v825 = vrot.slane %v819, 1
        %v826 = vrot.slane %v820, 1
        %v827 = vrot.slane %v821, 1
        %v831 = vmax.f32 %v819, %v825
        %v832 = vmax.f32 %v820, %v826
        %v833 = vmax.f32 %v821, %v827
        %v834 = vrot.slane %v819, 2
        %v835 = vrot.slane %v820, 2
        %v836 = vrot.slane %v821, 2
        %v840 = vmax.f32 %v831, %v834
        %v841 = vmax.f32 %v832, %v835
        %v842 = vmax.f32 %v833, %v836
        %843 = vst [vmem:[%s231] sm:$0x3f] %v840
        %844 = vst [vmem:[%s231 + $0x8] sm:$0x3f] %v841
        %845 = vst [vmem:[%s231 + $0x10] sm:$0x3f] %v842
        %s846 = smul.u32 3, %s23
        %p847 = scmp.lt.s32.totalorder %s22, 1
        %s848 = scalar_select %p847, %s22, 1
        %p849 = scmp.lt.s32.totalorder %s846, 2
        %s850 = scalar_select %p849, %s846, 2
        %s851 = smul.addr %s848, 3
        %s852 = sadd.s32 %s850, %s851
        %s853 = smul.addr %s852, 8
        %s854 = scalar_lea.vmem %s3, %s853
        // Predicated region
        $region41: #{tpu_custom_call.1} parent=31 // pred_check
          %p855 = pneg %p120
        $region42: #{tpu_custom_call.1} parent=31 // pred_check_branch
          %857 = sbr.rel (%p855) target = $region44
        $region43: #{tpu_custom_call.1} parent=31 // pred_region
          %s858 = smul.u32 3, %s23
        $region44: #{tpu_custom_call.1} parent=31 // pred_fallthru
          _
      $region32: #{tpu_custom_call.1} parent=5 // pred_fallthru
        _
      %p859 = scmp.le.s32.totalorder 2, %s13
      // Predicated region
      $region45: #{tpu_custom_call.1} parent=5 // pred_check
        %p860 = pneg %p859
      $region46: #{tpu_custom_call.1} parent=5 // pred_check_branch
        %862 = sbr.rel (%p860) target = $region48
      $region47: #{tpu_custom_call.1} parent=5 // pred_region
        %s863 = ssub.s32 %s13, 2
        // Predicated region
        $region49: #{tpu_custom_call.1} parent=47 // pred_check
          %p864 = pneg %p126
        $region50: #{tpu_custom_call.1} parent=47 // pred_check_branch
          %866 = sbr.rel (%p864) target = $region52
        $region51: #{tpu_custom_call.1} parent=47 // pred_region
          %s867 = smul.u32 3, %s25
          %p868 = scmp.lt.s32.totalorder %s24, 1
          %s869 = scalar_select %p868, %s24, 1
          %p870 = scmp.lt.s32.totalorder %s867, 2
          %s871 = scalar_select %p870, %s867, 2
          %s872 = smul.addr %s869, 3
          %s873 = sadd.s32 %s871, %s872
          %s874 = smul.addr %s873, 8
          %s875 = scalar_lea.vmem %s3, %s874
        $region52: #{tpu_custom_call.1} parent=47 // pred_fallthru
          _
      $region48: #{tpu_custom_call.1} parent=5 // pred_fallthru
        _
    $region6: #{tpu_custom_call.1} parent=1 // loop_footer
      %s17 = sadd.s32 1, %s13
    $region7: #{tpu_custom_call.1} parent=1 // loop_footer_branch
      %12 = sbr.rel target = $region3
    $region8: #{tpu_custom_call.1} parent=1 // loop_exit
      _
    %876 = vsyncpa [#allocation3], 1
    %s877 = scalar_lea.sflag [#allocation3], 1
    %878 = vsyncpa %s877, 1
    %879 = vsyncpa [#allocation5], 1

</llo_original>
